<compile_context>
chip_gen: v7x
topology: tpu7x:2x2x1
jax: 0.10.0
libtpu: 0.0.40
codegen_flags: <defaults>
</compile_context>

<pallas_src>
import functools
import math

import jax
import jax.numpy as jnp
import numpy as np
from jax.experimental import pallas as pl
from jax.experimental.pallas import tpu as pltpu

LANES = 128
SUBLANES = 8
MAX_BLOCK_BYTES = 2 * 1024 * 1024   # per tile; in+out, double-buffered ~= 8 MiB VMEM
MIN_SPLIT_BYTES = 1 * 1024 * 1024   # above this, force >=2 row tiles (v7x megacore)


# ----------------------------- kernel -------------------------------------- #

def _copy_kernel(x_ref, o_ref):
    # Identity copy of one lane-dense tile (a reshape moves no elements).
    o_ref[...] = x_ref[...]


# ----------------------------- helpers ------------------------------------- #

def _resolve_shape(shape, total):
    """Resolve a single -1 entry, like torch.Tensor.view."""
    shape = list(shape)
    if -1 in shape:
        idx = shape.index(-1)
        known = 1
        for i, s in enumerate(shape):
            if i != idx:
                known *= int(s)
        assert known > 0 and total % known == 0, "view shape incompatible with input size"
        shape[idx] = total // known
    assert math.prod(shape) == total, "view shape incompatible with input size"
    return tuple(int(s) for s in shape)


def _factor_2d(total):
    """Factor total = rows * cols with cols as lane-friendly as possible."""
    # Preferred: lane-dense minor dim (multiple of 128), widest first.
    for cols in (4096, 2048, 1024, 512, 256, 128):
        if total % cols == 0:
            return total // cols, cols
    # Fallback (element count not a multiple of 128): the largest divisor
    # <= 4096 becomes the full-extent minor dim, so row tiling stays legal
    # under the (8,128) rule.  Stores may be masked if cols < 128.
    # TODO(synk): pad odd-sized inputs to a 128 multiple + masked edge tile.
    best, d = 1, 1
    while d * d <= total:
        if total % d == 0:
            for c in (d, total // d):
                if c <= 4096 and c > best:
                    best = c
        d += 1
    return total // best, best


def _choose_row_tile(rows, cols, itemsize):
    """Sublane-aligned row-tile that fits the VMEM budget; split for megacore."""
    sub = SUBLANES * max(1, 4 // itemsize)          # 8 f32 / 16 bf16 / 32 int8
    bytes_per_row = max(1, cols * itemsize)
    cap = max(sub, (MAX_BLOCK_BYTES // bytes_per_row) // sub * sub)
    if rows > cap:
        return cap                                   # tiled; edge block padded
    if rows >= 2 * sub and rows * bytes_per_row >= MIN_SPLIT_BYTES:
        # Fits one block, but split in two so both TensorCores on v7x get work.
        half = (((rows + 1) // 2) + sub - 1) // sub * sub
        return min(rows, half)
    return rows                                      # full-extent block (always legal)


# ----------------------------- wrapper ------------------------------------- #

@functools.partial(jax.jit, static_argnames=("shape",))
def view_pallas(x, shape):
    """Pallas implementation of View(shape).forward(x) == x.view(*shape)."""
    total = x.size
    out_shape = _resolve_shape(shape, total)
    if total == 0:
        return jnp.reshape(x, out_shape)

    itemsize = x.dtype.itemsize
    rows, cols = _factor_2d(total)
    x2 = x.reshape(rows, cols)          # metadata-only: present a lane-dense slab
    tm = _choose_row_tile(rows, cols, itemsize)

    y2 = pl.pallas_call(
        _copy_kernel,
        out_shape=jax.ShapeDtypeStruct((rows, cols), x.dtype),
        grid=(pl.cdiv(rows, tm),),
        in_specs=[pl.BlockSpec((tm, cols), lambda i: (i, 0))],
        out_specs=pl.BlockSpec((tm, cols), lambda i: (i, 0)),
        compiler_params=pltpu.CompilerParams(
            dimension_semantics=("parallel",),       # shard row tiles across TCs (v7x)
            vmem_limit_bytes=32 * 1024 * 1024,
        ),
    )(x2)
    return y2.reshape(out_shape)


# ----------------------------- reference ----------------------------------- #

def view_ref(x, shape):
    return jnp.reshape(x, _resolve_shape(shape, x.size))


# ------------------------------- main --------------------------------------- #

if __name__ == "__main__":
    key = jax.random.PRNGKey(0)
    k1, k2, k3 = jax.random.split(key, 3)

    # Case 1: View((2, 4, 256)) flattening the spatial dims of a (2,4,16,16) map.
    x1 = jax.random.normal(k1, (2, 4, 16, 16), dtype=jnp.float32)
    shape1 = (2, 4, 256)
    out1 = jax.block_until_ready(view_pallas(x1, shape1))
    np.testing.assert_array_equal(np.asarray(out1), np.asarray(view_ref(x1, shape1)))

    # Case 2: View((-1, 4096)) on a larger bf16 tensor — exercises the tiled,
    # "parallel" grid path (multiple lane-dense 4096-wide row tiles).
    x2 = jax.random.normal(k2, (8, 32, 64, 64), dtype=jnp.bfloat16)
    shape2 = (-1, 4096)
    out2 = jax.block_until_ready(view_pallas(x2, shape2))
    np.testing.assert_array_equal(np.asarray(out2), np.asarray(view_ref(x2, shape2)))

    # Case 3: element count not a multiple of 128 — largest-divisor fallback slab.
    x3 = jax.random.normal(k3, (2, 3, 5), dtype=jnp.float32)
    shape3 = (6, 5)
    out3 = jax.block_until_ready(view_pallas(x3, shape3))
    np.testing.assert_array_equal(np.asarray(out3), np.asarray(view_ref(x3, shape3)))

    print("KERNEL_OK")
</pallas_src>

<mosaic_0001>
module attributes {stable_mosaic.version = 11 : i64} {
  func.func @_copy_kernel(%arg0: i32, %arg1: memref<1x2048xf32, #tpu.memory_space<vmem>>, %arg2: memref<1x2048xf32, #tpu.memory_space<vmem>>) attributes {dimension_semantics = [#tpu.dimension_semantics<parallel>], iteration_bounds = array<i64: 1>, scalar_prefetch = 0 : i64, scratch_operands = 0 : i64, tpu.core_type = #tpu.core_type<tc>, window_params = [{transform_indices = @transform_0, window_bounds = array<i64: 1, 2048>}, {transform_indices = @transform_1, window_bounds = array<i64: 1, 2048>}]} {
    %c0 = arith.constant 0 : index
    %c0_0 = arith.constant 0 : index
    %0 = vector.load %arg1[%c0, %c0_0] : memref<1x2048xf32, #tpu.memory_space<vmem>>, vector<1x2048xf32>
    %c0_1 = arith.constant 0 : index
    %c0_2 = arith.constant 0 : index
    %1 = vector.load %arg2[%c0_1, %c0_2] : memref<1x2048xf32, #tpu.memory_space<vmem>>, vector<1x2048xf32>
    tpu.vector_store %arg2[%c0_1, %c0_2], %0 {strides = array<i32>} : memref<1x2048xf32, #tpu.memory_space<vmem>>, vector<1x2048xf32>,
    return
  }
  func.func @transform_0(%arg0: i32) -> (i32, i32) {
    %c0_i32 = arith.constant 0 : i32
    %c0_i32_0 = arith.constant 0 : i32
    return %arg0, %c0_i32 : i32, i32
  }
  func.func @transform_1(%arg0: i32) -> (i32, i32) {
    %c0_i32 = arith.constant 0 : i32
    %c0_i32_0 = arith.constant 0 : i32
    return %arg0, %c0_i32 : i32, i32
  }
}

</mosaic_0001>

<llo_original>
// kernel: view_pallas.1
$region0: #{view_pallas.1}
  #allocation0 [shape = 'u32[]', space=smem, size = 0x4, offset = 0x4, fixed_abs, tag = 'smem constant byte address 0x4 - core index']
  #allocation1 [shape = 'u32[144,128]{1,0:T(1,128)}', space=vmem, size = 0x12000, scoped, tag = 'internal scratch']
  %s0 = inlined_call_operand.vmem [shape: f32[1,2048], index: 0, kind: input, shape index: {}]
  %s1 = inlined_call_operand.vmem [shape: f32[1,2048], index: 1, kind: output, shape index: {}]
  %s2 = sld [smem:[#allocation0]]
  $region14: #{view_pallas.1} parent=0
    _
  %s4 = ssub.s32 1, %s2
  %s5 = scalar_select 0, %s4, %s2
  // Predicated region
  $region2: #{view_pallas.1} parent=0 // pred_check
    _
  $region3: #{view_pallas.1} parent=0 // pred_check_branch
    %7 = sbr.rel (0) target = $region5
  $region4: #{view_pallas.1} parent=0 // pred_region
    _
  $region5: #{view_pallas.1} parent=0 // pred_fallthru
    _
  %v8 = vld [vmem:[%s0] sm:$0xff]
  %v9 = vld [vmem:[%s0 + $0x8] sm:$0xff]
  %10 = vst [vmem:[%s1] sm:$0xff] %v8
  %11 = vst [vmem:[%s1 + $0x8] sm:$0xff] %v9
  // Predicated region
  $region6: #{view_pallas.1} parent=0 // pred_check
    _
  $region7: #{view_pallas.1} parent=0 // pred_check_branch
    %13 = sbr.rel (0) target = $region9
  $region8: #{view_pallas.1} parent=0 // pred_region
    _
  $region9: #{view_pallas.1} parent=0 // pred_fallthru
    _
  // Predicated region
  $region10: #{view_pallas.1} parent=0 // pred_check
    _
  $region11: #{view_pallas.1} parent=0 // pred_check_branch
    %15 = sbr.rel (0) target = $region13
  $region12: #{view_pallas.1} parent=0 // pred_region
    _
  $region13: #{view_pallas.1} parent=0 // pred_fallthru
    _

</llo_original>
